<compile_context>
chip_gen: v7x
topology: tpu7x:2x2x1
jax: 0.10.0
libtpu: 0.0.40
codegen_flags: <defaults>
</compile_context>

<pallas_src>
import functools

import jax
import jax.numpy as jnp
from jax.experimental import pallas as pl
from jax.experimental.pallas import tpu as pltpu


def _round_up(x, m):
    return ((x + m - 1) // m) * m


# ----------------------------------------------------------------------------
# Fast path: flattened (tb, F*D) lane-dense block.
# ----------------------------------------------------------------------------
def _fm_flat_kernel(x_ref, o_ref, *, embed_dim):
    # x_ref: (tb, F*D) lane-dense tile.  o_ref: (tb, 1).
    tb, FD = x_ref.shape
    D = embed_dim
    # Accumulation width: D itself when D is already lane-aligned, else one
    # vreg (128 lanes).  The wrapper guarantees FD % W == 0 and (W==128 => D|128).
    W = D if D % 128 == 0 else 128
    n_chunks = FD // W

    s_acc = jnp.zeros((tb, W), dtype=jnp.float32)   # partial field sums
    ssq = jnp.zeros((tb,), dtype=jnp.float32)       # sum of squares, reduced
    for c in range(n_chunks):                       # static unroll, small count
        xc = x_ref[:, c * W:(c + 1) * W].astype(jnp.float32)  # aligned, dense vld
        s_acc = s_acc + xc
        ssq = ssq + jnp.sum(xc * xc, axis=1)

    if W == D:
        # s_acc already holds the per-position field sums s[d].
        sq_sum = jnp.sum(s_acc * s_acc, axis=1)
    else:
        # Finish the field reduction with cyclic intra-vreg lane rolls: after
        # log2(128 // D) roll+add steps every lane j holds the full field sum
        # for embedding position (j mod D), replicated 128/D times, so
        # sum_d s[d]^2 == (D/128) * sum over the 128 lanes of s_acc^2.
        shift = D
        while shift < 128:
            s_acc = s_acc + pltpu.roll(s_acc, shift=shift, axis=1)
            shift *= 2
        sq_sum = (float(D) / 128.0) * jnp.sum(s_acc * s_acc, axis=1)

    out = 0.5 * (sq_sum - ssq)                      # (tb,)
    o_ref[...] = out[:, None].astype(o_ref.dtype)


# ----------------------------------------------------------------------------
# Fallback path: arbitrary (F, D), 3-D block, plain sublane/lane reductions.
# ----------------------------------------------------------------------------
def _fm_3d_kernel(x_ref, o_ref):
    x = x_ref[...].astype(jnp.float32)              # (tb, F, D)
    s = jnp.sum(x, axis=1)                          # (tb, D)  sublane reduce
    ssq = jnp.sum(x * x, axis=1)                    # (tb, D)  sublane reduce
    out = 0.5 * jnp.sum(s * s - ssq, axis=1)        # (tb,)    lane reduce
    o_ref[...] = out[:, None].astype(o_ref.dtype)


def fm_forward(inputs, *, tb=None, vmem_budget_bytes=20 << 20,
               max_rows_per_tile=8192):
    """FM cross term.  inputs: (B, F, D).  Returns (B, 1) in the input dtype.

    bf16 inputs are supported and halve HBM traffic; accumulation stays f32.
    """
    B, F, D = inputs.shape
    dtype = inputs.dtype
    if B == 0:
        return jnp.zeros((0, 1), dtype=dtype)
    itemsize = jnp.dtype(dtype).itemsize
    FD = F * D

    fast = (D % 128 == 0) or (128 % D == 0 and FD % 128 == 0)

    if fast:
        W = D if D % 128 == 0 else 128
        row_in_bytes = FD * itemsize                # lane-dense, no padding
        row_work_bytes = 3 * W * 4                  # f32 chunk + accumulators
        x = inputs.reshape(B, FD)                   # free, contiguous reshape
        kernel = functools.partial(_fm_flat_kernel, embed_dim=D)

        def make_in_spec(t):
            return pl.BlockSpec((t, FD), lambda i: (i, 0))
    else:
        # dtype-dependent sublane tile: 8 (f32) / 16 (bf16) / 32 (int8, fp8)
        sub = max(8, 32 // itemsize)
        f_pad = _round_up(F, sub)
        d_pad = _round_up(D, 128)
        row_in_bytes = f_pad * d_pad * itemsize
        row_work_bytes = f_pad * d_pad * 4 + 2 * d_pad * 4
        x = inputs
        kernel = _fm_3d_kernel

        def make_in_spec(t):
            return pl.BlockSpec((t, F, D), lambda i: (i, 0, 0))

    # --- batch-tile selection ------------------------------------------------
    # Largest multiple of 128 whose double-buffered input block plus f32
    # working set stays within the VMEM budget.
    per_row = 2 * row_in_bytes + row_work_bytes
    t = (vmem_budget_bytes // per_row) // 128 * 128
    t = min(t, max_rows_per_tile, _round_up(B, 128))
    t = max(t, 128)
    if tb is not None:
        t = max(128, min(t, _round_up(tb, 128)))
    # v7x megacore: keep >= 2 "parallel" grid steps when blocks stay >= ~1 MiB.
    half = _round_up((B + 1) // 2, 128)
    if half * row_in_bytes >= (1 << 20):
        t = min(t, half)
    # Rebalance the tile to the grid-step count to avoid large padding waste.
    g = -(-B // t)
    t = _round_up(-(-B // g), 128)

    B_pad = _round_up(B, t)
    if B_pad != B:
        # Zero rows contribute exactly 0 to the cross term; sliced off below.
        pad = ((0, B_pad - B),) + ((0, 0),) * (x.ndim - 1)
        x = jnp.pad(x, pad)
    grid_b = B_pad // t

    cp_kwargs = dict(dimension_semantics=("parallel",))
    est_bytes = t * per_row + (2 << 20)
    if est_bytes > (12 << 20):
        # 32 MiB is <= the scoped default on v6e/v7x and far below physical
        # VMEM on every generation (v7x: 64 MiB/TC), so it is always safe.
        cp_kwargs["vmem_limit_bytes"] = 32 << 20

    cost = pl.CostEstimate(
        flops=3 * B * FD,
        transcendentals=0,
        bytes_accessed=B * FD * itemsize + B * itemsize,
    )

    out = pl.pallas_call(
        kernel,
        out_shape=jax.ShapeDtypeStruct((B_pad, 1), dtype),
        grid_spec=pltpu.PrefetchScalarGridSpec(
            num_scalar_prefetch=0,
            grid=(grid_b,),
            in_specs=[make_in_spec(t)],
            out_specs=pl.BlockSpec((t, 1), lambda i: (i, 0)),
        ),
        compiler_params=pltpu.CompilerParams(**cp_kwargs),
        cost_estimate=cost,
    )(x)

    return out[:B]


def _fm_reference(x):
    xf = x.astype(jnp.float32)
    s = jnp.sum(xf, axis=1, keepdims=True)
    sos = jnp.sum(xf * xf, axis=1, keepdims=True)
    return (0.5 * jnp.sum(s * s - sos, axis=2)).astype(x.dtype)


if __name__ == "__main__":
    key = jax.random.PRNGKey(0)

    # Small FM-style shapes: batch=16, fields=8, embedding dim=32 (fast path).
    B, F, D = 16, 8, 32
    x = jax.random.normal(key, (B, F, D), dtype=jnp.float32)
    out = jax.block_until_ready(fm_forward(x))
    ref = _fm_reference(x)
    assert out.shape == (B, 1)
    assert jnp.allclose(out, ref, rtol=1e-5, atol=1e-5)

    # Ragged batch (exercises the zero-padding / tail path).
    B2 = 10
    x2 = jax.random.normal(jax.random.PRNGKey(1), (B2, F, D), dtype=jnp.float32)
    out2 = jax.block_until_ready(fm_forward(x2))
    ref2 = _fm_reference(x2)
    assert out2.shape == (B2, 1)
    assert jnp.allclose(out2, ref2, rtol=1e-5, atol=1e-5)

    # Non-lane-aligned shape (exercises the general 3-D fallback path).
    B3, F3, D3 = 12, 5, 20
    x3 = jax.random.normal(jax.random.PRNGKey(2), (B3, F3, D3), dtype=jnp.float32)
    out3 = jax.block_until_ready(fm_forward(x3))
    ref3 = _fm_reference(x3)
    assert out3.shape == (B3, 1)
    assert jnp.allclose(out3, ref3, rtol=1e-5, atol=1e-5)

    print("KERNEL_OK")
</pallas_src>

<mosaic_0001>
module attributes {stable_mosaic.version = 11 : i64} {
  func.func @_fm_flat_kernel(%arg0: i32, %arg1: memref<128x256xf32, #tpu.memory_space<vmem>>, %arg2: memref<128x1xf32, #tpu.memory_space<vmem>>) attributes {dimension_semantics = [#tpu.dimension_semantics<parallel>], iteration_bounds = array<i64: 1>, scalar_prefetch = 0 : i64, scratch_operands = 0 : i64, tpu.core_type = #tpu.core_type<tc>, window_params = [{transform_indices = @transform_0, window_bounds = array<i64: 128, 256>}, {transform_indices = @transform_1, window_bounds = array<i64: 128, 1>}]} {
    %cst = arith.constant 0.000000e+00 : f32
    %0 = vector.broadcast %cst : f32 to vector<128x128xf32>
    %cst_0 = arith.constant 0.000000e+00 : f32
    %1 = vector.broadcast %cst_0 : f32 to vector<128xf32>
    %c0 = arith.constant 0 : index
    %c0_1 = arith.constant 0 : index
    %2 = vector.load %arg1[%c0, %c0_1] : memref<128x256xf32, #tpu.memory_space<vmem>>, vector<128x128xf32>
    %3 = arith.addf %0, %2 : vector<128x128xf32>
    %4 = arith.mulf %2, %2 : vector<128x128xf32>
    %cst_2 = arith.constant dense<0.000000e+00> : vector<128xf32>
    %5 = vector.multi_reduction <add>, %4, %cst_2 [1] : vector<128x128xf32> to vector<128xf32>
    %6 = arith.addf %1, %5 : vector<128xf32>
    %c0_3 = arith.constant 0 : index
    %c128 = arith.constant 128 : index
    %7 = vector.load %arg1[%c0_3, %c128] : memref<128x256xf32, #tpu.memory_space<vmem>>, vector<128x128xf32>
    %8 = arith.addf %3, %7 : vector<128x128xf32>
    %9 = arith.mulf %7, %7 : vector<128x128xf32>
    %cst_4 = arith.constant dense<0.000000e+00> : vector<128xf32>
    %10 = vector.multi_reduction <add>, %9, %cst_4 [1] : vector<128x128xf32> to vector<128xf32>
    %11 = arith.addf %6, %10 : vector<128xf32>
    %c32_i32 = arith.constant 32 : i32
    %12 = tpu.dynamic_rotate %8 by %c32_i32 dim 1 : vector<128x128xf32>, i32 -> vector<128x128xf32>
    %13 = arith.addf %8, %12 : vector<128x128xf32>
    %c64_i32 = arith.constant 64 : i32
    %14 = tpu.dynamic_rotate %13 by %c64_i32 dim 1 : vector<128x128xf32>, i32 -> vector<128x128xf32>
    %15 = arith.addf %13, %14 : vector<128x128xf32>
    %16 = arith.mulf %15, %15 : vector<128x128xf32>
    %cst_5 = arith.constant dense<0.000000e+00> : vector<128xf32>
    %17 = vector.multi_reduction <add>, %16, %cst_5 [1] : vector<128x128xf32> to vector<128xf32>
    %cst_6 = arith.constant 2.500000e-01 : f32
    %18 = vector.broadcast %cst_6 : f32 to vector<128xf32>
    %19 = arith.mulf %18, %17 : vector<128xf32>
    %20 = arith.subf %19, %11 : vector<128xf32>
    %cst_7 = arith.constant 5.000000e-01 : f32
    %21 = vector.broadcast %cst_7 : f32 to vector<128xf32>
    %22 = arith.mulf %21, %20 : vector<128xf32>
    %23 = vector.shape_cast %22 : vector<128xf32> to vector<128x1xf32>
    %c0_8 = arith.constant 0 : index
    %c0_9 = arith.constant 0 : index
    %24 = vector.load %arg2[%c0_8, %c0_9] : memref<128x1xf32, #tpu.memory_space<vmem>>, vector<128x1xf32>
    tpu.vector_store %arg2[%c0_8, %c0_9], %23 {strides = array<i32>} : memref<128x1xf32, #tpu.memory_space<vmem>>, vector<128x1xf32>,
    return
  }
  func.func @transform_0(%arg0: i32) -> (i32, i32) {
    %c0_i32 = arith.constant 0 : i32
    %c0_i32_0 = arith.constant 0 : i32
    return %arg0, %c0_i32 : i32, i32
  }
  func.func @transform_1(%arg0: i32) -> (i32, i32) {
    %c0_i32 = arith.constant 0 : i32
    %c0_i32_0 = arith.constant 0 : i32
    return %arg0, %c0_i32 : i32, i32
  }
}

</mosaic_0001>

<llo_original>
// kernel: tpu_custom_call.1
$region0: #{tpu_custom_call.1}
  #allocation0 [shape = 'u32[]', space=smem, size = 0x4, offset = 0x4, fixed_abs, tag = 'smem constant byte address 0x4 - core index']
  #allocation1 [shape = 'u32[144,128]{1,0:T(1,128)}', space=vmem, size = 0x12000, scoped, tag = 'internal scratch']
  %s0 = inlined_call_operand.hbm [shape: f32[128,256], index: 0, kind: input, shape index: {}]
  %s1 = inlined_call_operand.vmem [shape: f32[128,1], index: 1, kind: output, shape index: {}]
  %s2 = sld [smem:[#allocation0]]
  $region18: #{tpu_custom_call.1} parent=0
    _
  %s4 = ssub.s32 1, %s2
  %s5 = scalar_select 0, %s4, %s2
  $region1: #{tpu_custom_call.1} parent=0
    #allocation2 [shape = 'u8[131072]{0}', space=vmem, size = 0x20000, scoped, tag = 'input window, operand 0, single buffered']
    #allocation3 [shape = 's32[1]{0}', space=sflag, size = 0x4, scoped, tag = 'scoped memory for tpu_custom_call.1']
    %6 = vsyncpa [#allocation3], 0
    // Predicated region
    $region2: #{tpu_custom_call.1} parent=1 // pred_check
      _
    $region3: #{tpu_custom_call.1} parent=1 // pred_check_branch
      %8 = sbr.rel (0) target = $region5
    $region4: #{tpu_custom_call.1} parent=1 // pred_region
      %s10 = ssub.s32 4096, 4096
      %11 = vsyncadd [#allocation3], %s10
      %s12 = sshll.u32 [#allocation2], 4
      %s13 = int_to_ptr.vmem [resolvable:$true] %s12
      %18 = dma.hbm_to_vmem [thread:$0]  %s0, 4096, %s13, [#allocation3], 256, 256, 16
    $region5: #{tpu_custom_call.1} parent=1 // pred_fallthru
      _
    // Predicated region
    $region6: #{tpu_custom_call.1} parent=1 // pred_check
      _
    $region7: #{tpu_custom_call.1} parent=1 // pred_check_branch
      %20 = sbr.rel (0) target = $region9
    $region8: #{tpu_custom_call.1} parent=1 // pred_region
      %21 = dma.done [#allocation3], 4096
    $region9: #{tpu_custom_call.1} parent=1 // pred_fallthru
      _
    %v22 = vld [vmem:[#allocation2] sm:$0xff]
    %v23 = vld [vmem:[#allocation2 + $0x10] sm:$0xff]
    %v24 = vld [vmem:[#allocation2 + $0x20] sm:$0xff]
    %v25 = vld [vmem:[#allocation2 + $0x30] sm:$0xff]
    %v26 = vld [vmem:[#allocation2 + $0x40] sm:$0xff]
    %v27 = vld [vmem:[#allocation2 + $0x50] sm:$0xff]
    %v28 = vld [vmem:[#allocation2 + $0x60] sm:$0xff]
    %v29 = vld [vmem:[#allocation2 + $0x70] sm:$0xff]
    %v30 = vld [vmem:[#allocation2 + $0x80] sm:$0xff]
    %v31 = vld [vmem:[#allocation2 + $0x90] sm:$0xff]
    %v32 = vld [vmem:[#allocation2 + $0xa0] sm:$0xff]
    %v33 = vld [vmem:[#allocation2 + $0xb0] sm:$0xff]
    %v34 = vld [vmem:[#allocation2 + $0xc0] sm:$0xff]
    %v35 = vld [vmem:[#allocation2 + $0xd0] sm:$0xff]
    %v36 = vld [vmem:[#allocation2 + $0xe0] sm:$0xff]
    %v37 = vld [vmem:[#allocation2 + $0xf0] sm:$0xff]
    %v38 = vadd.f32 %v22, 0.0
    %v39 = vadd.f32 %v23, 0.0
    %v40 = vadd.f32 %v24, 0.0
    %v41 = vadd.f32 %v25, 0.0
    %v42 = vadd.f32 %v26, 0.0
    %v43 = vadd.f32 %v27, 0.0
    %v44 = vadd.f32 %v28, 0.0
    %v45 = vadd.f32 %v29, 0.0
    %v46 = vadd.f32 %v30, 0.0
    %v47 = vadd.f32 %v31, 0.0
    %v48 = vadd.f32 %v32, 0.0
    %v49 = vadd.f32 %v33, 0.0
    %v50 = vadd.f32 %v34, 0.0
    %v51 = vadd.f32 %v35, 0.0
    %v52 = vadd.f32 %v36, 0.0
    %v53 = vadd.f32 %v37, 0.0
    %v54 = vmul.f32 %v22, %v22
    %v55 = vmul.f32 %v23, %v23
    %v56 = vmul.f32 %v24, %v24
    %v57 = vmul.f32 %v25, %v25
    %v58 = vmul.f32 %v26, %v26
    %v59 = vmul.f32 %v27, %v27
    %v60 = vmul.f32 %v28, %v28
    %v61 = vmul.f32 %v29, %v29
    %v62 = vmul.f32 %v30, %v30
    %v63 = vmul.f32 %v31, %v31
    %v64 = vmul.f32 %v32, %v32
    %v65 = vmul.f32 %v33, %v33
    %v66 = vmul.f32 %v34, %v34
    %v67 = vmul.f32 %v35, %v35
    %v68 = vmul.f32 %v36, %v36
    %v69 = vmul.f32 %v37, %v37
    %70 = vadd.xlane.f32.xlu0 %v54
    %v71 = vpop.xlane.xlu0 %70
    %72 = vadd.xlane.f32.xlu0 %v55
    %v73 = vpop.xlane.xlu0 %72
    %74 = vadd.xlane.f32.xlu0 %v56
    %v75 = vpop.xlane.xlu0 %74
    %76 = vadd.xlane.f32.xlu0 %v57
    %v77 = vpop.xlane.xlu0 %76
    %78 = vadd.xlane.f32.xlu0 %v58
    %v79 = vpop.xlane.xlu0 %78
    %80 = vadd.xlane.f32.xlu0 %v59
    %v81 = vpop.xlane.xlu0 %80
    %82 = vadd.xlane.f32.xlu0 %v60
    %v83 = vpop.xlane.xlu0 %82
    %84 = vadd.xlane.f32.xlu0 %v61
    %v85 = vpop.xlane.xlu0 %84
    %86 = vadd.xlane.f32.xlu0 %v62
    %v87 = vpop.xlane.xlu0 %86
    %88 = vadd.xlane.f32.xlu0 %v63
    %v89 = vpop.xlane.xlu0 %88
    %90 = vadd.xlane.f32.xlu0 %v64
    %v91 = vpop.xlane.xlu0 %90
    %92 = vadd.xlane.f32.xlu0 %v65
    %v93 = vpop.xlane.xlu0 %92
    %94 = vadd.xlane.f32.xlu0 %v66
    %v95 = vpop.xlane.xlu0 %94
    %96 = vadd.xlane.f32.xlu0 %v67
    %v97 = vpop.xlane.xlu0 %96
    %98 = vadd.xlane.f32.xlu0 %v68
    %v99 = vpop.xlane.xlu0 %98
    %100 = vadd.xlane.f32.xlu0 %v69
    %v101 = vpop.xlane.xlu0 %100
    %v102 = vadd.f32 %v71, 0.0
    %v103 = vadd.f32 %v73, 0.0
    %v104 = vadd.f32 %v75, 0.0
    %v105 = vadd.f32 %v77, 0.0
    %v106 = vadd.f32 %v79, 0.0
    %v107 = vadd.f32 %v81, 0.0
    %v108 = vadd.f32 %v83, 0.0
    %v109 = vadd.f32 %v85, 0.0
    %v110 = vadd.f32 %v87, 0.0
    %v111 = vadd.f32 %v89, 0.0
    %v112 = vadd.f32 %v91, 0.0
    %v113 = vadd.f32 %v93, 0.0
    %v114 = vadd.f32 %v95, 0.0
    %v115 = vadd.f32 %v97, 0.0
    %v116 = vadd.f32 %v99, 0.0
    %v117 = vadd.f32 %v101, 0.0
    %v118 = vld [vmem:[#allocation2 + $0x8] sm:$0xff]
    %v119 = vld [vmem:[#allocation2 + $0x18] sm:$0xff]
    %v120 = vld [vmem:[#allocation2 + $0x28] sm:$0xff]
    %v121 = vld [vmem:[#allocation2 + $0x38] sm:$0xff]
    %v122 = vld [vmem:[#allocation2 + $0x48] sm:$0xff]
    %v123 = vld [vmem:[#allocation2 + $0x58] sm:$0xff]
    %v124 = vld [vmem:[#allocation2 + $0x68] sm:$0xff]
    %v125 = vld [vmem:[#allocation2 + $0x78] sm:$0xff]
    %v126 = vld [vmem:[#allocation2 + $0x88] sm:$0xff]
    %v127 = vld [vmem:[#allocation2 + $0x98] sm:$0xff]
    %v128 = vld [vmem:[#allocation2 + $0xa8] sm:$0xff]
    %v129 = vld [vmem:[#allocation2 + $0xb8] sm:$0xff]
    %v130 = vld [vmem:[#allocation2 + $0xc8] sm:$0xff]
    %v131 = vld [vmem:[#allocation2 + $0xd8] sm:$0xff]
    %v132 = vld [vmem:[#allocation2 + $0xe8] sm:$0xff]
    %v133 = vld [vmem:[#allocation2 + $0xf8] sm:$0xff]
    %v134 = vadd.f32 %v38, %v118
    %v135 = vadd.f32 %v39, %v119
    %v136 = vadd.f32 %v40, %v120
    %v137 = vadd.f32 %v41, %v121
    %v138 = vadd.f32 %v42, %v122
    %v139 = vadd.f32 %v43, %v123
    %v140 = vadd.f32 %v44, %v124
    %v141 = vadd.f32 %v45, %v125
    %v142 = vadd.f32 %v46, %v126
    %v143 = vadd.f32 %v47, %v127
    %v144 = vadd.f32 %v48, %v128
    %v145 = vadd.f32 %v49, %v129
    %v146 = vadd.f32 %v50, %v130
    %v147 = vadd.f32 %v51, %v131
    %v148 = vadd.f32 %v52, %v132
    %v149 = vadd.f32 %v53, %v133
    %v150 = vmul.f32 %v118, %v118
    %v151 = vmul.f32 %v119, %v119
    %v152 = vmul.f32 %v120, %v120
    %v153 = vmul.f32 %v121, %v121
    %v154 = vmul.f32 %v122, %v122
    %v155 = vmul.f32 %v123, %v123
    %v156 = vmul.f32 %v124, %v124
    %v157 = vmul.f32 %v125, %v125
    %v158 = vmul.f32 %v126, %v126
    %v159 = vmul.f32 %v127, %v127
    %v160 = vmul.f32 %v128, %v128
    %v161 = vmul.f32 %v129, %v129
    %v162 = vmul.f32 %v130, %v130
    %v163 = vmul.f32 %v131, %v131
    %v164 = vmul.f32 %v132, %v132
    %v165 = vmul.f32 %v133, %v133
    %166 = vadd.xlane.f32.xlu0 %v150
    %v167 = vpop.xlane.xlu0 %166
    %168 = vadd.xlane.f32.xlu0 %v151
    %v169 = vpop.xlane.xlu0 %168
    %170 = vadd.xlane.f32.xlu0 %v152
    %v171 = vpop.xlane.xlu0 %170
    %172 = vadd.xlane.f32.xlu0 %v153
    %v173 = vpop.xlane.xlu0 %172
    %174 = vadd.xlane.f32.xlu0 %v154
    %v175 = vpop.xlane.xlu0 %174
    %176 = vadd.xlane.f32.xlu0 %v155
    %v177 = vpop.xlane.xlu0 %176
    %178 = vadd.xlane.f32.xlu0 %v156
    %v179 = vpop.xlane.xlu0 %178
    %180 = vadd.xlane.f32.xlu0 %v157
    %v181 = vpop.xlane.xlu0 %180
    %182 = vadd.xlane.f32.xlu0 %v158
    %v183 = vpop.xlane.xlu0 %182
    %184 = vadd.xlane.f32.xlu0 %v159
    %v185 = vpop.xlane.xlu0 %184
    %186 = vadd.xlane.f32.xlu0 %v160
    %v187 = vpop.xlane.xlu0 %186
    %188 = vadd.xlane.f32.xlu0 %v161
    %v189 = vpop.xlane.xlu0 %188
    %190 = vadd.xlane.f32.xlu0 %v162
    %v191 = vpop.xlane.xlu0 %190
    %192 = vadd.xlane.f32.xlu0 %v163
    %v193 = vpop.xlane.xlu0 %192
    %194 = vadd.xlane.f32.xlu0 %v164
    %v195 = vpop.xlane.xlu0 %194
    %196 = vadd.xlane.f32.xlu0 %v165
    %v197 = vpop.xlane.xlu0 %196
    %v198 = vadd.f32 %v102, %v167
    %v199 = vadd.f32 %v103, %v169
    %v200 = vadd.f32 %v104, %v171
    %v201 = vadd.f32 %v105, %v173
    %v202 = vadd.f32 %v106, %v175
    %v203 = vadd.f32 %v107, %v177
    %v204 = vadd.f32 %v108, %v179
    %v205 = vadd.f32 %v109, %v181
    %v206 = vadd.f32 %v110, %v183
    %v207 = vadd.f32 %v111, %v185
    %v208 = vadd.f32 %v112, %v187
    %v209 = vadd.f32 %v113, %v189
    %v210 = vadd.f32 %v114, %v191
    %v211 = vadd.f32 %v115, %v193
    %v212 = vadd.f32 %v116, %v195
    %v213 = vadd.f32 %v117, %v197
    %214 = vrot.lane.b32.xlu0 %v134, 32
    %v215 = vpop.permute.xlu0 %214
    %216 = vrot.lane.b32.xlu0 %v135, 32
    %v217 = vpop.permute.xlu0 %216
    %218 = vrot.lane.b32.xlu0 %v136, 32
    %v219 = vpop.permute.xlu0 %218
    %220 = vrot.lane.b32.xlu0 %v137, 32
    %v221 = vpop.permute.xlu0 %220
    %222 = vrot.lane.b32.xlu0 %v138, 32
    %v223 = vpop.permute.xlu0 %222
    %224 = vrot.lane.b32.xlu0 %v139, 32
    %v225 = vpop.permute.xlu0 %224
    %226 = vrot.lane.b32.xlu0 %v140, 32
    %v227 = vpop.permute.xlu0 %226
    %228 = vrot.lane.b32.xlu0 %v141, 32
    %v229 = vpop.permute.xlu0 %228
    %230 = vrot.lane.b32.xlu0 %v142, 32
    %v231 = vpop.permute.xlu0 %230
    %232 = vrot.lane.b32.xlu0 %v143, 32
    %v233 = vpop.permute.xlu0 %232
    %234 = vrot.lane.b32.xlu0 %v144, 32
    %v235 = vpop.permute.xlu0 %234
    %236 = vrot.lane.b32.xlu0 %v145, 32
    %v237 = vpop.permute.xlu0 %236
    %238 = vrot.lane.b32.xlu0 %v146, 32
    %v239 = vpop.permute.xlu0 %238
    %240 = vrot.lane.b32.xlu0 %v147, 32
    %v241 = vpop.permute.xlu0 %240
    %242 = vrot.lane.b32.xlu0 %v148, 32
    %v243 = vpop.permute.xlu0 %242
    %244 = vrot.lane.b32.xlu0 %v149, 32
    %v245 = vpop.permute.xlu0 %244
    %v246 = vadd.f32 %v134, %v215
    %v247 = vadd.f32 %v135, %v217
    %v248 = vadd.f32 %v136, %v219
    %v249 = vadd.f32 %v137, %v221
    %v250 = vadd.f32 %v138, %v223
    %v251 = vadd.f32 %v139, %v225
    %v252 = vadd.f32 %v140, %v227
    %v253 = vadd.f32 %v141, %v229
    %v254 = vadd.f32 %v142, %v231
    %v255 = vadd.f32 %v143, %v233
    %v256 = vadd.f32 %v144, %v235
    %v257 = vadd.f32 %v145, %v237
    %v258 = vadd.f32 %v146, %v239
    %v259 = vadd.f32 %v147, %v241
    %v260 = vadd.f32 %v148, %v243
    %v261 = vadd.f32 %v149, %v245
    %262 = vrot.lane.b32.xlu0 %v246, 64
    %v263 = vpop.permute.xlu0 %262
    %264 = vrot.lane.b32.xlu0 %v247, 64
    %v265 = vpop.permute.xlu0 %264
    %266 = vrot.lane.b32.xlu0 %v248, 64
    %v267 = vpop.permute.xlu0 %266
    %268 = vrot.lane.b32.xlu0 %v249, 64
    %v269 = vpop.permute.xlu0 %268
    %270 = vrot.lane.b32.xlu0 %v250, 64
    %v271 = vpop.permute.xlu0 %270
    %272 = vrot.lane.b32.xlu0 %v251, 64
    %v273 = vpop.permute.xlu0 %272
    %274 = vrot.lane.b32.xlu0 %v252, 64
    %v275 = vpop.permute.xlu0 %274
    %276 = vrot.lane.b32.xlu0 %v253, 64
    %v277 = vpop.permute.xlu0 %276
    %278 = vrot.lane.b32.xlu0 %v254, 64
    %v279 = vpop.permute.xlu0 %278
    %280 = vrot.lane.b32.xlu0 %v255, 64
    %v281 = vpop.permute.xlu0 %280
    %282 = vrot.lane.b32.xlu0 %v256, 64
    %v283 = vpop.permute.xlu0 %282
    %284 = vrot.lane.b32.xlu0 %v257, 64
    %v285 = vpop.permute.xlu0 %284
    %286 = vrot.lane.b32.xlu0 %v258, 64
    %v287 = vpop.permute.xlu0 %286
    %288 = vrot.lane.b32.xlu0 %v259, 64
    %v289 = vpop.permute.xlu0 %288
    %290 = vrot.lane.b32.xlu0 %v260, 64
    %v291 = vpop.permute.xlu0 %290
    %292 = vrot.lane.b32.xlu0 %v261, 64
    %v293 = vpop.permute.xlu0 %292
    %v294 = vadd.f32 %v246, %v263
    %v295 = vadd.f32 %v247, %v265
    %v296 = vadd.f32 %v248, %v267
    %v297 = vadd.f32 %v249, %v269
    %v298 = vadd.f32 %v250, %v271
    %v299 = vadd.f32 %v251, %v273
    %v300 = vadd.f32 %v252, %v275
    %v301 = vadd.f32 %v253, %v277
    %v302 = vadd.f32 %v254, %v279
    %v303 = vadd.f32 %v255, %v281
    %v304 = vadd.f32 %v256, %v283
    %v305 = vadd.f32 %v257, %v285
    %v306 = vadd.f32 %v258, %v287
    %v307 = vadd.f32 %v259, %v289
    %v308 = vadd.f32 %v260, %v291
    %v309 = vadd.f32 %v261, %v293
    %v310 = vmul.f32 %v294, %v294
    %v311 = vmul.f32 %v295, %v295
    %v312 = vmul.f32 %v296, %v296
    %v313 = vmul.f32 %v297, %v297
    %v314 = vmul.f32 %v298, %v298
    %v315 = vmul.f32 %v299, %v299
    %v316 = vmul.f32 %v300, %v300
    %v317 = vmul.f32 %v301, %v301
    %v318 = vmul.f32 %v302, %v302
    %v319 = vmul.f32 %v303, %v303
    %v320 = vmul.f32 %v304, %v304
    %v321 = vmul.f32 %v305, %v305
    %v322 = vmul.f32 %v306, %v306
    %v323 = vmul.f32 %v307, %v307
    %v324 = vmul.f32 %v308, %v308
    %v325 = vmul.f32 %v309, %v309
    %326 = vadd.xlane.f32.xlu0 %v310
    %v327 = vpop.xlane.xlu0 %326
    %328 = vadd.xlane.f32.xlu0 %v311
    %v329 = vpop.xlane.xlu0 %328
    %330 = vadd.xlane.f32.xlu0 %v312
    %v331 = vpop.xlane.xlu0 %330
    %332 = vadd.xlane.f32.xlu0 %v313
    %v333 = vpop.xlane.xlu0 %332
    %334 = vadd.xlane.f32.xlu0 %v314
    %v335 = vpop.xlane.xlu0 %334
    %336 = vadd.xlane.f32.xlu0 %v315
    %v337 = vpop.xlane.xlu0 %336
    %338 = vadd.xlane.f32.xlu0 %v316
    %v339 = vpop.xlane.xlu0 %338
    %340 = vadd.xlane.f32.xlu0 %v317
    %v341 = vpop.xlane.xlu0 %340
    %342 = vadd.xlane.f32.xlu0 %v318
    %v343 = vpop.xlane.xlu0 %342
    %344 = vadd.xlane.f32.xlu0 %v319
    %v345 = vpop.xlane.xlu0 %344
    %346 = vadd.xlane.f32.xlu0 %v320
    %v347 = vpop.xlane.xlu0 %346
    %348 = vadd.xlane.f32.xlu0 %v321
    %v349 = vpop.xlane.xlu0 %348
    %350 = vadd.xlane.f32.xlu0 %v322
    %v351 = vpop.xlane.xlu0 %350
    %352 = vadd.xlane.f32.xlu0 %v323
    %v353 = vpop.xlane.xlu0 %352
    %354 = vadd.xlane.f32.xlu0 %v324
    %v355 = vpop.xlane.xlu0 %354
    %356 = vadd.xlane.f32.xlu0 %v325
    %v357 = vpop.xlane.xlu0 %356
    %v358 = vmul.f32 %v327, 0.25
    %v359 = vmul.f32 %v329, 0.25
    %v360 = vmul.f32 %v331, 0.25
    %v361 = vmul.f32 %v333, 0.25
    %v362 = vmul.f32 %v335, 0.25
    %v363 = vmul.f32 %v337, 0.25
    %v364 = vmul.f32 %v339, 0.25
    %v365 = vmul.f32 %v341, 0.25
    %v366 = vmul.f32 %v343, 0.25
    %v367 = vmul.f32 %v345, 0.25
    %v368 = vmul.f32 %v347, 0.25
    %v369 = vmul.f32 %v349, 0.25
    %v370 = vmul.f32 %v351, 0.25
    %v371 = vmul.f32 %v353, 0.25
    %v372 = vmul.f32 %v355, 0.25
    %v373 = vmul.f32 %v357, 0.25
    %v374 = vsub.f32 %v358, %v198
    %v375 = vsub.f32 %v359, %v199
    %v376 = vsub.f32 %v360, %v200
    %v377 = vsub.f32 %v361, %v201
    %v378 = vsub.f32 %v362, %v202
    %v379 = vsub.f32 %v363, %v203
    %v380 = vsub.f32 %v364, %v204
    %v381 = vsub.f32 %v365, %v205
    %v382 = vsub.f32 %v366, %v206
    %v383 = vsub.f32 %v367, %v207
    %v384 = vsub.f32 %v368, %v208
    %v385 = vsub.f32 %v369, %v209
    %v386 = vsub.f32 %v370, %v210
    %v387 = vsub.f32 %v371, %v211
    %v388 = vsub.f32 %v372, %v212
    %v389 = vsub.f32 %v373, %v213
    %v390 = vmul.f32 %v374, 0.5
    %v391 = vmul.f32 %v375, 0.5
    %v392 = vmul.f32 %v376, 0.5
    %v393 = vmul.f32 %v377, 0.5
    %v394 = vmul.f32 %v378, 0.5
    %v395 = vmul.f32 %v379, 0.5
    %v396 = vmul.f32 %v380, 0.5
    %v397 = vmul.f32 %v381, 0.5
    %v398 = vmul.f32 %v382, 0.5
    %v399 = vmul.f32 %v383, 0.5
    %v400 = vmul.f32 %v384, 0.5
    %v401 = vmul.f32 %v385, 0.5
    %v402 = vmul.f32 %v386, 0.5
    %v403 = vmul.f32 %v387, 0.5
    %v404 = vmul.f32 %v388, 0.5
    %v405 = vmul.f32 %v389, 0.5
    %vm406 = vcmask 7168
    %407 = vst.msk [vmem:[%s1] sm:$0xff] %vm406, %v390
    %408 = vst.msk [vmem:[%s1 + $0x8] sm:$0xff] %vm406, %v391
    %409 = vst.msk [vmem:[%s1 + $0x10] sm:$0xff] %vm406, %v392
    %410 = vst.msk [vmem:[%s1 + $0x18] sm:$0xff] %vm406, %v393
    %411 = vst.msk [vmem:[%s1 + $0x20] sm:$0xff] %vm406, %v394
    %412 = vst.msk [vmem:[%s1 + $0x28] sm:$0xff] %vm406, %v395
    %413 = vst.msk [vmem:[%s1 + $0x30] sm:$0xff] %vm406, %v396
    %414 = vst.msk [vmem:[%s1 + $0x38] sm:$0xff] %vm406, %v397
    %415 = vst.msk [vmem:[%s1 + $0x40] sm:$0xff] %vm406, %v398
    %416 = vst.msk [vmem:[%s1 + $0x48] sm:$0xff] %vm406, %v399
    %417 = vst.msk [vmem:[%s1 + $0x50] sm:$0xff] %vm406, %v400
    %418 = vst.msk [vmem:[%s1 + $0x58] sm:$0xff] %vm406, %v401
    %419 = vst.msk [vmem:[%s1 + $0x60] sm:$0xff] %vm406, %v402
    %420 = vst.msk [vmem:[%s1 + $0x68] sm:$0xff] %vm406, %v403
    %421 = vst.msk [vmem:[%s1 + $0x70] sm:$0xff] %vm406, %v404
    %422 = vst.msk [vmem:[%s1 + $0x78] sm:$0xff] %vm406, %v405
    // Predicated region
    $region10: #{tpu_custom_call.1} parent=1 // pred_check
      _
    $region11: #{tpu_custom_call.1} parent=1 // pred_check_branch
      %424 = sbr.rel (0) target = $region13
    $region12: #{tpu_custom_call.1} parent=1 // pred_region
      _
    $region13: #{tpu_custom_call.1} parent=1 // pred_fallthru
      _
    // Predicated region
    $region14: #{tpu_custom_call.1} parent=1 // pred_check
      _
    $region15: #{tpu_custom_call.1} parent=1 // pred_check_branch
      %426 = sbr.rel (0) target = $region17
    $region16: #{tpu_custom_call.1} parent=1 // pred_region
      _
    $region17: #{tpu_custom_call.1} parent=1 // pred_fallthru
      _
    %427 = vsyncpa [#allocation3], 1

</llo_original>
